<compile_context>
chip_gen: v7x
topology: tpu7x:2x2x1
jax: 0.10.0
libtpu: 0.0.40
codegen_flags: <defaults>
</compile_context>

<pallas_src>
import jax
import jax.numpy as jnp
from jax.experimental import pallas as pl
from jax.experimental.pallas import tpu as pltpu

KH = KW = 4
STRIDE = 2
PAD = 1
TN = 128          # output-channel (lane) tile


def _down_kernel(alpha_ref, p_ref, w_ref, b_ref, o_ref):
    # alpha_ref : (1,) f32 in SMEM              (shared PReLU slope)
    # p_ref     : (TM, K)  compute_dtype        (im2col patch rows)
    # w_ref     : (K, TN)  compute_dtype
    # b_ref     : (1, TN)  f32
    # o_ref     : (TM, TN) out_dtype
    acc = jnp.dot(p_ref[...], w_ref[...], preferred_element_type=jnp.float32)
    acc = acc + b_ref[...]
    alpha = alpha_ref[0]
    o_ref[...] = jnp.where(acc > 0, acc, alpha * acc).astype(o_ref.dtype)


def _pick_tm(nm):
    """Row-tile size: big tiles (<=512 rows) but >=2 grid steps when possible
    so both v7x TensorCores get work even for a single small image."""
    tm = 512
    while tm > 16 and nm < 2 * tm:
        tm //= 2
    return tm


def _vmem_budget():
    """Generation-aware VMEM request (v5e/v6e: 128 MiB phys, v7x: 64 MiB)."""
    cap = 64 * 1024 * 1024
    try:
        info = pltpu.get_tpu_info()
        cap = int(getattr(info, "vmem_capacity_bytes", cap))
    except Exception:
        pass
    return max(16 * 1024 * 1024, min(cap // 2, 64 * 1024 * 1024))


def down_forward(x, weight, bias, alpha, *,
                 compute_dtype=jnp.bfloat16, out_dtype=None):
    """x: [N, C_in, H, W] (NCHW).  weight: [C_out, C_in, 4, 4].  bias: [C_out].
    alpha: scalar PReLU slope.  Returns [N, C_out, H//2, W//2] (NCHW)."""
    N, C_in, H, W = x.shape
    C_out = weight.shape[0]
    if H % 2 or W % 2:
        raise ValueError("down_forward requires even H and W")
    out_dtype = x.dtype if out_dtype is None else out_dtype

    Ho, Wo = H // STRIDE, W // STRIDE
    Hq, Wq = Ho + 1, Wo + 1                 # (H+2)//2, (W+2)//2
    K = KH * KW * C_in                      # contraction depth (all 16 taps)
    NM = N * Ho * Wo

    # ---- pack input: NCHW -> padded NHWC -> stride-2 phase cells -> im2col ----
    # (one fused XLA pass over the input; never re-read tap-by-tap in HBM)
    xh = jnp.transpose(x, (0, 2, 3, 1))                            # (N,H,W,C)
    xp = jnp.pad(xh, ((0, 0), (PAD, PAD), (PAD, PAD), (0, 0)))     # (N,H+2,W+2,C)
    # phase cell (hq,wq) holds x_pad[2*hq+s, 2*wq+t, c] for s,t in {0,1}
    xq = xp.reshape(N, Hq, 2, Wq, 2, C_in).transpose(0, 1, 3, 2, 4, 5)
    xq = xq.reshape(N, Hq, Wq, 4 * C_in)
    # output pixel (ho,wo) reads the 2x2 window of phase cells -> features
    # ordered (dh, dw, s, t, c), i.e. tap (kh, kw) = (2*dh+s, 2*dw+t)
    patches = jnp.concatenate(
        [xq[:, dh:dh + Ho, dw:dw + Wo, :] for dh in (0, 1) for dw in (0, 1)],
        axis=-1)                                                   # (N,Ho,Wo,16C)
    patches = patches.reshape(NM, K).astype(compute_dtype)

    # ---- row tiling (M axis) ----
    TM = _pick_tm(NM)
    NM_pad = pl.cdiv(NM, TM) * TM
    if NM_pad != NM:
        patches = jnp.pad(patches, ((0, NM_pad - NM), (0, 0)))

    # ---- weights / bias: (dh,dw,s,t,c)-ordered, lane-dense C_out ----
    C_out_pad = pl.cdiv(C_out, TN) * TN
    w2 = weight.reshape(C_out, C_in, 2, 2, 2, 2)      # (o, c, dh, s, dw, t)
    w2 = jnp.transpose(w2, (2, 4, 3, 5, 1, 0))        # (dh, dw, s, t, c, o)
    w2 = w2.reshape(K, C_out)
    w2 = jnp.pad(w2, ((0, 0), (0, C_out_pad - C_out))).astype(compute_dtype)
    b2 = jnp.pad(bias.astype(jnp.float32).reshape(1, C_out),
                 ((0, 0), (0, C_out_pad - C_out)))
    alpha1 = jnp.asarray(alpha, jnp.float32).reshape(1)

    # grid: (C_out tiles, row tiles); rows innermost so the weight tile stays
    # resident in VMEM while patch rows stream.
    grid = (C_out_pad // TN, NM_pad // TM)

    out = pl.pallas_call(
        _down_kernel,
        out_shape=jax.ShapeDtypeStruct((NM_pad, C_out_pad), out_dtype),
        grid_spec=pl.GridSpec(
            grid=grid,
            in_specs=[
                pl.BlockSpec(memory_space=pltpu.MemorySpace.SMEM),   # alpha
                pl.BlockSpec((TM, K), lambda j, i: (i, 0)),          # patches
                pl.BlockSpec((K, TN), lambda j, i: (0, j)),          # weight
                pl.BlockSpec((1, TN), lambda j, i: (0, j)),          # bias
            ],
            out_specs=pl.BlockSpec((TM, TN), lambda j, i: (i, j)),
        ),
        compiler_params=pltpu.CompilerParams(
            dimension_semantics=("parallel", "parallel"),
            vmem_limit_bytes=_vmem_budget()),
    )(alpha1, patches, w2, b2)

    out = out[:NM, :C_out].reshape(N, Ho, Wo, C_out)
    return jnp.transpose(out, (0, 3, 1, 2))      # back to NCHW (PyTorch interface)


def _reference(x, weight, bias, alpha):
    y = jax.lax.conv_general_dilated(
        x, weight, window_strides=(STRIDE, STRIDE),
        padding=((PAD, PAD), (PAD, PAD)),
        dimension_numbers=("NCHW", "OIHW", "NCHW"))
    y = y + bias.reshape(1, -1, 1, 1)
    return jnp.where(y > 0, y, alpha * y)


if __name__ == "__main__":
    key = jax.random.PRNGKey(0)
    k1, k2, k3 = jax.random.split(key, 3)

    N, C_in, H, W = 2, 4, 16, 16
    C_out = 8

    x = jax.random.normal(k1, (N, C_in, H, W), dtype=jnp.float32)
    weight = jax.random.normal(k2, (C_out, C_in, KH, KW), dtype=jnp.float32) * 0.1
    bias = jax.random.normal(k3, (C_out,), dtype=jnp.float32) * 0.1
    alpha = jnp.float32(0.25)   # nn.PReLU() default: single shared slope 0.25

    ref = _reference(x, weight, bias, alpha)

    # f32-operand path: tight correctness check
    out_f32 = jax.block_until_ready(
        down_forward(x, weight, bias, alpha, compute_dtype=jnp.float32))
    assert out_f32.shape == (N, C_out, H // 2, W // 2)
    assert jnp.allclose(out_f32, ref, atol=1e-3, rtol=1e-3)

    # default path (bf16 operands, f32 accumulation): looser tolerance
    out_bf16 = jax.block_until_ready(down_forward(x, weight, bias, alpha))
    assert out_bf16.shape == (N, C_out, H // 2, W // 2)
    assert jnp.allclose(out_bf16, ref, atol=6e-2, rtol=5e-2)

    print("KERNEL_OK")
</pallas_src>

<mosaic_0001>
module attributes {stable_mosaic.version = 11 : i64} {
  func.func @_down_kernel(%arg0: i32, %arg1: i32, %arg2: memref<1xf32, #tpu.memory_space<smem>>, %arg3: memref<64x64xf32, #tpu.memory_space<vmem>>, %arg4: memref<64x128xf32, #tpu.memory_space<vmem>>, %arg5: memref<1x128xf32, #tpu.memory_space<vmem>>, %arg6: memref<64x128xf32, #tpu.memory_space<vmem>>) attributes {dimension_semantics = [#tpu.dimension_semantics<parallel>, #tpu.dimension_semantics<parallel>], iteration_bounds = array<i64: 1, 2>, scalar_prefetch = 0 : i64, scratch_operands = 0 : i64, tpu.core_type = #tpu.core_type<tc>, window_params = [{transform_indices = @transform_0, window_bounds = array<i64: 1>}, {transform_indices = @transform_1, window_bounds = array<i64: 64, 64>}, {transform_indices = @transform_2, window_bounds = array<i64: 64, 128>}, {transform_indices = @transform_3, window_bounds = array<i64: 1, 128>}, {transform_indices = @transform_4, window_bounds = array<i64: 64, 128>}]} {
    %c0 = arith.constant 0 : index
    %c0_0 = arith.constant 0 : index
    %0 = vector.load %arg3[%c0, %c0_0] : memref<64x64xf32, #tpu.memory_space<vmem>>, vector<64x64xf32>
    %c0_1 = arith.constant 0 : index
    %c0_2 = arith.constant 0 : index
    %1 = vector.load %arg4[%c0_1, %c0_2] : memref<64x128xf32, #tpu.memory_space<vmem>>, vector<64x128xf32>
    %cst = arith.constant dense<0.000000e+00> : vector<64x128xf32>
    %2 = tpu.matmul %0, %1, %cst {dimension_numbers = #tpu.dot_dimension_numbers<[1], [0], [0], [1], [0, 0, 1, 1], [], []>} : vector<64x64xf32>, vector<64x128xf32>, vector<64x128xf32> -> vector<64x128xf32>
    %c0_3 = arith.constant 0 : index
    %c0_4 = arith.constant 0 : index
    %3 = vector.load %arg5[%c0_3, %c0_4] : memref<1x128xf32, #tpu.memory_space<vmem>>, vector<1x128xf32>
    %4 = vector.broadcast %3 : vector<1x128xf32> to vector<64x128xf32>
    %5 = arith.addf %2, %4 : vector<64x128xf32>
    %c0_5 = arith.constant 0 : index
    %6 = memref.load %arg2[%c0_5] : memref<1xf32, #tpu.memory_space<smem>>
    %cst_6 = arith.constant 0.000000e+00 : f32
    %7 = vector.broadcast %cst_6 : f32 to vector<64x128xf32>
    %8 = arith.cmpf ogt, %5, %7 : vector<64x128xf32>
    %9 = vector.broadcast %6 : f32 to vector<64x128xf32>
    %10 = arith.mulf %9, %5 : vector<64x128xf32>
    %11 = arith.select %8, %5, %10 : vector<64x128xi1>, vector<64x128xf32>
    %c0_7 = arith.constant 0 : index
    %c0_8 = arith.constant 0 : index
    %12 = vector.load %arg6[%c0_7, %c0_8] : memref<64x128xf32, #tpu.memory_space<vmem>>, vector<64x128xf32>
    tpu.vector_store %arg6[%c0_7, %c0_8], %11 {strides = array<i32>} : memref<64x128xf32, #tpu.memory_space<vmem>>, vector<64x128xf32>,
    return
  }
  func.func @transform_0(%arg0: i32, %arg1: i32) -> i32 {
    %c0_i32 = arith.constant 0 : i32
    %c0_i32_0 = arith.constant 0 : i32
    return %c0_i32 : i32
  }
  func.func @transform_1(%arg0: i32, %arg1: i32) -> (i32, i32) {
    %c0_i32 = arith.constant 0 : i32
    %c0_i32_0 = arith.constant 0 : i32
    return %arg1, %c0_i32 : i32, i32
  }
  func.func @transform_2(%arg0: i32, %arg1: i32) -> (i32, i32) {
    %c0_i32 = arith.constant 0 : i32
    %c0_i32_0 = arith.constant 0 : i32
    return %c0_i32, %arg0 : i32, i32
  }
  func.func @transform_3(%arg0: i32, %arg1: i32) -> (i32, i32) {
    %c0_i32 = arith.constant 0 : i32
    %c0_i32_0 = arith.constant 0 : i32
    return %c0_i32, %arg0 : i32, i32
  }
  func.func @transform_4(%arg0: i32, %arg1: i32) -> (i32, i32) {
    %c0_i32 = arith.constant 0 : i32
    return %arg1, %arg0 : i32, i32
  }
}

</mosaic_0001>

<llo_original>
// kernel: tpu_custom_call.1
$region0: #{tpu_custom_call.1}
  #allocation0 [shape = 'u32[]', space=smem, size = 0x4, offset = 0x4, fixed_abs, tag = 'smem constant byte address 0x4 - core index']
  #allocation1 [shape = 'u32[144,128]{1,0:T(1,128)}', space=vmem, size = 0x12000, scoped, tag = 'internal scratch']
  #allocation2 [shape = 'f32[1]{0:T(128)S(6)}', space=smem, size = 0x200, scoped, tag = 'scoped memory for tpu_custom_call.1']
  %s0 = inlined_call_operand.<no memory space> [shape: f32[1], index: 0, kind: input, shape index: {}]
  %s1 = inlined_call_operand.vmem [shape: f32[128,64], index: 1, kind: input, shape index: {}]
  %s2 = inlined_call_operand.vmem [shape: f32[64,128], index: 2, kind: input, shape index: {}]
  %s3 = inlined_call_operand.vmem [shape: f32[1,128], index: 3, kind: input, shape index: {}]
  %s4 = inlined_call_operand.hbm [shape: f32[128,128], index: 4, kind: output, shape index: {}]
  %s5 = sld [smem:[#allocation0]]
  $region49: #{tpu_custom_call.1} parent=0
    _
  %s7 = ssub.s32 1, %s5
  %s8 = scalar_select 0, %s7, %s5
  %9 = sst [smem:[#allocation2]] %s0
  $region1: #{tpu_custom_call.1} parent=0
    #allocation3 [shape = 'u8[65536]{0}', space=vmem, size = 0x10000, scoped, tag = 'output window, operand 0']
    #allocation4 [shape = 's32[2]{0}', space=sflag, size = 0x8, scoped, tag = 'scoped memory for tpu_custom_call.1']
    %10 = vsyncpa [#allocation4], 0
    %s11 = scalar_lea.sflag [#allocation4], 1
    %12 = vsyncpa %s11, 0
    loop: start=0, step=1, limit=4
    $region2: #{tpu_custom_call.1} parent=1 // loop_pre_header
      _
    $region3: #{tpu_custom_call.1} parent=1 // loop_header
      %s14 = sphi 0, %s18
      %p15 = scmp.ge.s32.totalorder %s14, 4
      %s21 = sphi 0, %s33
      %s22 = sphi 0, %s29
      %s23 = sphi 0, %s21
      %s24 = sphi 0, %s22
      %s25 = sphi 0, %s23
      %s26 = sphi 0, %s24
      %s34 = sphi 0, %s34
      %s36 = sphi 0, %s34
      %s37 = sphi 0, %s36
      %s51 = sphi 0, %s37
      %s57 = sphi 0, %s59
      %s60 = sphi 0, %s57
      %s61 = sphi 0, %s60
      %s77 = sphi 0, %s61
      %s83 = sphi 0, %s85
      %s86 = sphi 0, %s83
      %s87 = sphi 0, %s86
      %s103 = sphi 0, %s87
      %s109 = sphi 0, %s111
      %s112 = sphi 0, %s109
      %s113 = sphi 0, %s112
      %s129 = sphi 0, %s113
      %s137 = sphi 0, %s139
      %s140 = sphi 0, %s137
      %s141 = sphi 0, %s140
      %s157 = sphi 0, %s141
    $region4: #{tpu_custom_call.1} parent=1 // loop_header_branch
      %17 = sbr.rel (%p15) target = $region8
    $region5: #{tpu_custom_call.1} parent=1 // loop_body
      %s19 = ssub.s32 %s14, 1
      %s20 = ssub.s32 %s14, 2
      %s27 = sadd.s32 1, %s22
      %p28 = scmp.ge.s32.totalorder %s27, 2
      %s29 = scalar_select %p28, 0, %s27
      %s30 = sadd.s32 1, %s21
      %s31 = scalar_select %p28, %s30, %s21
      %p32 = scmp.ge.s32.totalorder %s31, 1
      %s33 = scalar_select %p32, 0, %s31
      %s35 = sadd.s32 %s34, 1
      %p38 = scmp.eq.s32.totalorder %s14, 1
      %p39 = scmp.ne.s32.totalorder %s34, %s36
      %p40 = scmp.eq.s32.totalorder %s14, 0
      %p41 = por %p39, %p40
      %p42 = scmp.ne.s32.totalorder %s34, %s36
      %p43 = scmp.eq.s32.totalorder %s19, 1
      %p44 = por %p42, %p43
      %p45 = scmp.ne.s32.totalorder %s36, %s37
      %p46 = scmp.eq.s32.totalorder %s19, 0
      %p47 = por %p45, %p46
      %p48 = scmp.ne.s32.totalorder %s36, %s37
      %p49 = scmp.eq.s32.totalorder %s20, 1
      %p50 = por %p48, %p49
      %p52 = scmp.ne.s32.totalorder %s37, %s51
      %p53 = scmp.eq.s32.totalorder %s20, 0
      %p54 = por %p52, %p53
      %s55 = ssub.s32 %s22, %s29
      %p56 = scmp.eq.s32.totalorder %s55, 0
      %s58 = sadd.s32 %s57, 1
      %s59 = scalar_select %p56, %s57, %s58
      %p62 = pneg %p56
      %p63 = scmp.eq.s32.totalorder %s14, 1
      %p64 = por %p62, %p63
      %p65 = scmp.ne.s32.totalorder %s57, %s60
      %p66 = scmp.eq.s32.totalorder %s14, 0
      %p67 = por %p65, %p66
      %p68 = scmp.ne.s32.totalorder %s57, %s60
      %p69 = scmp.eq.s32.totalorder %s19, 1
      %p70 = por %p68, %p69
      %p71 = scmp.ne.s32.totalorder %s60, %s61
      %p72 = scmp.eq.s32.totalorder %s19, 0
      %p73 = por %p71, %p72
      %p74 = scmp.ne.s32.totalorder %s60, %s61
      %p75 = scmp.eq.s32.totalorder %s20, 1
      %p76 = por %p74, %p75
      %p78 = scmp.ne.s32.totalorder %s61, %s77
      %p79 = scmp.eq.s32.totalorder %s20, 0
      %p80 = por %p78, %p79
      %s81 = ssub.s32 %s21, %s33
      %p82 = scmp.eq.s32.totalorder %s81, 0
      %s84 = sadd.s32 %s83, 1
      %s85 = scalar_select %p82, %s83, %s84
      %p88 = pneg %p82
      %p89 = scmp.eq.s32.totalorder %s14, 1
      %p90 = por %p88, %p89
      %p91 = scmp.ne.s32.totalorder %s83, %s86
      %p92 = scmp.eq.s32.totalorder %s14, 0
      %p93 = por %p91, %p92
      %p94 = scmp.ne.s32.totalorder %s83, %s86
      %p95 = scmp.eq.s32.totalorder %s19, 1
      %p96 = por %p94, %p95
      %p97 = scmp.ne.s32.totalorder %s86, %s87
      %p98 = scmp.eq.s32.totalorder %s19, 0
      %p99 = por %p97, %p98
      %p100 = scmp.ne.s32.totalorder %s86, %s87
      %p101 = scmp.eq.s32.totalorder %s20, 1
      %p102 = por %p100, %p101
      %p104 = scmp.ne.s32.totalorder %s87, %s103
      %p105 = scmp.eq.s32.totalorder %s20, 0
      %p106 = por %p104, %p105
      %s107 = ssub.s32 %s21, %s33
      %p108 = scmp.eq.s32.totalorder %s107, 0
      %s110 = sadd.s32 %s109, 1
      %s111 = scalar_select %p108, %s109, %s110
      %p114 = pneg %p108
      %p115 = scmp.eq.s32.totalorder %s14, 1
      %p116 = por %p114, %p115
      %p117 = scmp.ne.s32.totalorder %s109, %s112
      %p118 = scmp.eq.s32.totalorder %s14, 0
      %p119 = por %p117, %p118
      %p120 = scmp.ne.s32.totalorder %s109, %s112
      %p121 = scmp.eq.s32.totalorder %s19, 1
      %p122 = por %p120, %p121
      %p123 = scmp.ne.s32.totalorder %s112, %s113
      %p124 = scmp.eq.s32.totalorder %s19, 0
      %p125 = por %p123, %p124
      %p126 = scmp.ne.s32.totalorder %s112, %s113
      %p127 = scmp.eq.s32.totalorder %s20, 1
      %p128 = por %p126, %p127
      %p130 = scmp.ne.s32.totalorder %s113, %s129
      %p131 = scmp.eq.s32.totalorder %s20, 0
      %p132 = por %p130, %p131
      %s133 = ssub.s32 %s22, %s29
      %s134 = ssub.s32 %s21, %s33
      %s135 = sor.u32 %s133, %s134
      %p136 = scmp.eq.s32.totalorder %s135, 0
      %s138 = sadd.s32 %s137, 1
      %s139 = scalar_select %p136, %s137, %s138
      %p142 = pneg %p136
      %p143 = scmp.eq.s32.totalorder %s14, 1
      %p144 = por %p142, %p143
      %p145 = scmp.ne.s32.totalorder %s137, %s140
      %p146 = scmp.eq.s32.totalorder %s14, 0
      %p147 = por %p145, %p146
      %p148 = scmp.ne.s32.totalorder %s137, %s140
      %p149 = scmp.eq.s32.totalorder %s19, 1
      %p150 = por %p148, %p149
      %p151 = scmp.ne.s32.totalorder %s140, %s141
      %p152 = scmp.eq.s32.totalorder %s19, 0
      %p153 = por %p151, %p152
      %p154 = scmp.ne.s32.totalorder %s140, %s141
      %p155 = scmp.eq.s32.totalorder %s20, 1
      %p156 = por %p154, %p155
      %p158 = scmp.ne.s32.totalorder %s141, %s157
      %p159 = scmp.eq.s32.totalorder %s20, 0
      %p160 = por %p158, %p159
      %p161 = scmp.le.s32.totalorder 1, %s14
      %p162 = scmp.lt.s32.totalorder %s14, 3
      %p163 = pnand %p161, %p162
      %p164 = pneg %p163
      // Predicated region
      $region9: #{tpu_custom_call.1} parent=5 // pred_check
        _
      $region10: #{tpu_custom_call.1} parent=5 // pred_check_branch
        %166 = sbr.rel (%p163) target = $region12
      $region11: #{tpu_custom_call.1} parent=5 // pred_region
        %s167 = ssub.s32 %s14, 1
        // Predicated region
        $region13: #{tpu_custom_call.1} parent=11 // pred_check
          %p168 = pneg %p47
        $region14: #{tpu_custom_call.1} parent=11 // pred_check_branch
          %170 = sbr.rel (%p168) target = $region16
        $region15: #{tpu_custom_call.1} parent=11 // pred_region
          _
        $region16: #{tpu_custom_call.1} parent=11 // pred_fallthru
          _
        // Predicated region
        $region17: #{tpu_custom_call.1} parent=11 // pred_check
          %p171 = pneg %p99
        $region18: #{tpu_custom_call.1} parent=11 // pred_check_branch
          %173 = sbr.rel (%p171) target = $region20
        $region19: #{tpu_custom_call.1} parent=11 // pred_region
          %p174 = scmp.lt.s32.totalorder %s23, 0
          %s175 = scalar_select %p174, %s23, 0
          %s176 = smul.addr %s175, 8
          %s177 = scalar_lea.vmem %s2, %s176
        $region20: #{tpu_custom_call.1} parent=11 // pred_fallthru
          _
        // Predicated region
        $region21: #{tpu_custom_call.1} parent=11 // pred_check
          %p178 = pneg %p125
        $region22: #{tpu_custom_call.1} parent=11 // pred_check_branch
          %180 = sbr.rel (%p178) target = $region24
        $region23: #{tpu_custom_call.1} parent=11 // pred_region
          %p181 = scmp.lt.s32.totalorder %s23, 0
          %s182 = scalar_select %p181, %s23, 0
          %s183 = scalar_lea.vmem %s3, %s182
        $region24: #{tpu_custom_call.1} parent=11 // pred_fallthru
          _
      $region12: #{tpu_custom_call.1} parent=5 // pred_fallthru
        _
      %p184 = scmp.lt.s32.totalorder %s14, 2
      // Predicated region
      $region25: #{tpu_custom_call.1} parent=5 // pred_check
        %p185 = pneg %p184
      $region26: #{tpu_custom_call.1} parent=5 // pred_check_branch
        %187 = sbr.rel (%p185) target = $region28
      $region27: #{tpu_custom_call.1} parent=5 // pred_region
        // Predicated region
        $region29: #{tpu_custom_call.1} parent=27 // pred_check
          %p188 = pneg %p67
        $region30: #{tpu_custom_call.1} parent=27 // pred_check_branch
          %190 = sbr.rel (%p188) target = $region32
        $region31: #{tpu_custom_call.1} parent=27 // pred_region
          %s191 = smul.u32 8, %s22
          %p192 = scmp.lt.s32.totalorder %s191, 15
          %s193 = scalar_select %p192, %s191, 15
          %s194 = smul.addr %s193, 8
          %s195 = scalar_lea.vmem %s1, %s194
          %s196 = smul.u32 8, %s22
        $region32: #{tpu_custom_call.1} parent=27 // pred_fallthru
          _
      $region28: #{tpu_custom_call.1} parent=5 // pred_fallthru
        _
      %p197 = scmp.le.s32.totalorder 1, %s14
      %p198 = scmp.lt.s32.totalorder %s14, 3
      %p199 = pnand %p197, %p198
      %p200 = pneg %p199
      // Predicated region
      $region33: #{tpu_custom_call.1} parent=5 // pred_check
        _
      $region34: #{tpu_custom_call.1} parent=5 // pred_check_branch
        %202 = sbr.rel (%p199) target = $region36
      $region35: #{tpu_custom_call.1} parent=5 // pred_region
        %s203 = ssub.s32 %s14, 1
        %p204 = pneg %p47
        %p205 = pneg %p44
        %s206 = smul.u32 8, %s24
        %p207 = scmp.lt.s32.totalorder %s206, 15
        %s208 = scalar_select %p207, %s206, 15
        %s209 = smul.addr %s208, 8
        %s210 = scalar_lea.vmem %s1, %s209
        %p211 = pneg %p73
        %p212 = pneg %p70
        %p213 = scmp.lt.s32.totalorder %s23, 0
        %s214 = scalar_select %p213, %s23, 0
        %s215 = smul.addr %s214, 8
        %s216 = scalar_lea.vmem %s2, %s215
        %p217 = pneg %p99
        %p218 = pneg %p96
        %p219 = scmp.lt.s32.totalorder %s23, 0
        %s220 = scalar_select %p219, %s23, 0
        %s221 = scalar_lea.vmem %s3, %s220
        %p222 = pneg %p125
        %p223 = pneg %p122
        %p224 = pneg %p153
        %p225 = pneg %p150
        %s226 = sand.u32 %s140, 1
        %s227 = scalar_lea.sflag [#allocation4], %s226
        %s228 = sand.u32 %s140, 1
        %s229 = smul.addr %s228, 64
        %s230 = scalar_lea.vmem [#allocation3], %s229
        %s231 = smul.u32 8, %s24
        %p232 = scmp.lt.s32.totalorder %s231, 15
        %s233 = scalar_select %p232, %s231, 15
        %s234 = smul.addr %s233, 8
        %s235 = scalar_lea.vmem %s1, %s234
        %s236 = smul.u32 8, %s24
        %p237 = scmp.lt.s32.totalorder %s23, 0
        %s238 = scalar_select %p237, %s23, 0
        %s239 = smul.addr %s238, 8
        %s240 = scalar_lea.vmem %s2, %s239
        %p241 = scmp.lt.s32.totalorder %s23, 0
        %s242 = scalar_select %p241, %s23, 0
        %s243 = scalar_lea.vmem %s3, %s242
        %s244 = smul.u32 8, %s24
        %v245 = vld [vmem:[%s235] sm:$0xff]
        %v246 = vld [vmem:[%s235 + $0x8] sm:$0xff]
        %v247 = vld [vmem:[%s235 + $0x10] sm:$0xff]
        %v248 = vld [vmem:[%s235 + $0x18] sm:$0xff]
        %v249 = vld [vmem:[%s235 + $0x20] sm:$0xff]
        %v250 = vld [vmem:[%s235 + $0x28] sm:$0xff]
        %v251 = vld [vmem:[%s235 + $0x30] sm:$0xff]
        %v252 = vld [vmem:[%s235 + $0x38] sm:$0xff]
        %v253 = vld [vmem:[%s240] sm:$0xff]
        %v254 = vld [vmem:[%s240 + $0x8] sm:$0xff]
        %v255 = vld [vmem:[%s240 + $0x10] sm:$0xff]
        %v256 = vld [vmem:[%s240 + $0x18] sm:$0xff]
        %v257 = vld [vmem:[%s240 + $0x20] sm:$0xff]
        %v258 = vld [vmem:[%s240 + $0x28] sm:$0xff]
        %v259 = vld [vmem:[%s240 + $0x30] sm:$0xff]
        %v260 = vld [vmem:[%s240 + $0x38] sm:$0xff]
        %v261 = vld [vmem:[%s243] sm:$0x1]
        %v263 = vlaneseq
        %v264 = vshrl.u32 %v263, 7
        %v265 = vsub.s32 0, %v264
        %v266 = vrot.slane %v261, %v265
        %vm268 = vcmask 523264
        %v270 = vsel %vm268, %v245, 0
        %v273 = vsel %vm268, %v246, 0
        %v276 = vsel %vm268, %v247, 0
        %v279 = vsel %vm268, %v248, 0
        %v282 = vsel %vm268, %v249, 0
        %v285 = vsel %vm268, %v250, 0
        %v288 = vsel %vm268, %v251, 0
        %v291 = vsel %vm268, %v252, 0
        %293 = vmatprep.subr.mxu0 0.0
        %294 = vmatpush1.msra.mxu0 %v253
        %295 = vmatprep.subr.mxu0 0.0
        %296 = vmatpush1.msra.mxu0 %v254
        %297 = vmatprep.subr.mxu0 0.0
        %298 = vmatpush1.msra.mxu0 %v255
        %299 = vmatprep.subr.mxu0 0.0
        %300 = vmatpush1.msra.mxu0 %v256
        %301 = vmatprep.subr.mxu0 0.0
        %302 = vmatpush1.msra.mxu0 %v257
        %303 = vmatprep.subr.mxu0 0.0
        %304 = vmatpush1.msra.mxu0 %v258
        %305 = vmatprep.subr.mxu0 0.0
        %306 = vmatpush1.msra.mxu0 %v259
        %307 = vmatprep.subr.mxu0 0.0
        %308 = vmatpush1.msra.mxu0 %v260
        %309 = vmatprep.subr.mxu0 0.0
        %310 = vmatpush1.msra.mxu0 0.0
        %311 = vmatprep.subr.mxu0 0.0
        %312 = vmatpush1.msra.mxu0 0.0
        %313 = vmatprep.subr.mxu0 0.0
        %314 = vmatpush1.msra.mxu0 0.0
        %315 = vmatprep.subr.mxu0 0.0
        %316 = vmatpush1.msra.mxu0 0.0
        %317 = vmatprep.subr.mxu0 0.0
        %318 = vmatpush1.msra.mxu0 0.0
        %319 = vmatprep.subr.mxu0 0.0
        %320 = vmatpush1.msra.mxu0 0.0
        %321 = vmatprep.subr.mxu0 0.0
        %322 = vmatpush1.msra.mxu0 0.0
        %323 = vmatprep.subr.mxu0 0.0
        %324 = vmatpush1.msra.mxu0 0.0
        %325 = vmatprep.subr.mxu0 0.0
        %326 = vmatpush1.msra.mxu0 0.0
        %327 = vmatprep.subr.mxu0 0.0
        %328 = vmatpush1.msra.mxu0 0.0
        %329 = vmatprep.subr.mxu0 0.0
        %330 = vmatpush1.msra.mxu0 0.0
        %331 = vmatprep.subr.mxu0 0.0
        %332 = vmatpush1.msra.mxu0 0.0
        %333 = vmatprep.subr.mxu0 0.0
        %334 = vmatpush1.msra.mxu0 0.0
        %335 = vmatprep.subr.mxu0 0.0
        %336 = vmatpush1.msra.mxu0 0.0
        %337 = vmatprep.subr.mxu0 0.0
        %338 = vmatpush1.msra.mxu0 0.0
        %339 = vmatprep.subr.mxu0 0.0
        %340 = vmatpush1.msra.mxu0 0.0
        %341 = vmatprep.subr.mxu0 0.0
        %342 = vmatpush1.msra.mxu0 0.0
        %343 = vmatprep.subr.mxu0 0.0
        %344 = vmatpush1.msra.mxu0 0.0
        %345 = vmatprep.subr.mxu0 0.0
        %346 = vmatpush1.msra.mxu0 0.0
        %347 = vmatprep.subr.mxu0 0.0
        %348 = vmatpush1.msra.mxu0 0.0
        %349 = vmatprep.subr.mxu0 0.0
        %350 = vmatpush1.msra.mxu0 0.0
        %351 = vmatprep.subr.mxu0 0.0
        %352 = vmatpush1.msra.mxu0 0.0
        %353 = vmatprep.subr.mxu0 0.0
        %354 = vmatpush1.msra.mxu0 0.0
        %355 = vmatprep.subr.mxu0 0.0
        %356 = vmatpush1.msra.mxu0 0.0
        %357 = vmatprep.mubr.f32.mxu0 0.0
        %358 = vmatmul.mubr.f32.gmra.mrb[0].mxu0 %v270
        %v359 = vpop.f32.mrb[0].mxu0
        %v360 = vadd.f32 %v266, %v359
        %v361 = vpop.f32.mrb[0].mxu0
        %362 = vmatprep.mubr.f32.mxu0 0.0
        %363 = vmatmul.mubr.f32.gmra.mrb[0].mxu0 %v273
        %v364 = vpop.f32.mrb[0].mxu0
        %v365 = vadd.f32 %v266, %v364
        %v366 = vpop.f32.mrb[0].mxu0
        %367 = vmatprep.mubr.f32.mxu0 0.0
        %368 = vmatmul.mubr.f32.gmra.mrb[0].mxu0 %v276
        %v369 = vpop.f32.mrb[0].mxu0
        %v370 = vadd.f32 %v266, %v369
        %v371 = vpop.f32.mrb[0].mxu0
        %372 = vmatprep.mubr.f32.mxu0 0.0
        %373 = vmatmul.mubr.f32.gmra.mrb[0].mxu0 %v279
        %v374 = vpop.f32.mrb[0].mxu0
        %v375 = vadd.f32 %v266, %v374
        %v376 = vpop.f32.mrb[0].mxu0
        %377 = vmatprep.mubr.f32.mxu0 0.0
        %378 = vmatmul.mubr.f32.gmra.mrb[0].mxu0 %v282
        %v379 = vpop.f32.mrb[0].mxu0
        %v380 = vadd.f32 %v266, %v379
        %v381 = vpop.f32.mrb[0].mxu0
        %382 = vmatprep.mubr.f32.mxu0 0.0
        %383 = vmatmul.mubr.f32.gmra.mrb[0].mxu0 %v285
        %v384 = vpop.f32.mrb[0].mxu0
        %v385 = vadd.f32 %v266, %v384
        %v386 = vpop.f32.mrb[0].mxu0
        %387 = vmatprep.mubr.f32.mxu0 0.0
        %388 = vmatmul.mubr.f32.gmra.mrb[0].mxu0 %v288
        %v389 = vpop.f32.mrb[0].mxu0
        %v390 = vadd.f32 %v266, %v389
        %v391 = vpop.f32.mrb[0].mxu0
        %392 = vmatprep.mubr.f32.mxu0 0.0
        %393 = vmatmul.mubr.f32.gmra.mrb[0].mxu0 %v291
        %v394 = vpop.f32.mrb[0].mxu0
        %v395 = vadd.f32 %v266, %v394
        %v396 = vpop.f32.mrb[0].mxu0
        %397 = vdwg.mxu0
        %s398 = sld [smem:[#allocation2]]
        %vm399 = vcmp.gt.f32.partialorder %v360, 0.0
        %vm400 = vcmp.gt.f32.partialorder %v365, 0.0
        %vm401 = vcmp.gt.f32.partialorder %v370, 0.0
        %vm402 = vcmp.gt.f32.partialorder %v375, 0.0
        %vm403 = vcmp.gt.f32.partialorder %v380, 0.0
        %vm404 = vcmp.gt.f32.partialorder %v385, 0.0
        %vm405 = vcmp.gt.f32.partialorder %v390, 0.0
        %vm406 = vcmp.gt.f32.partialorder %v395, 0.0
        %v407 = vstv %s398
        %v408 = vmul.f32 %v407, %v360
        %v409 = vmul.f32 %v407, %v365
        %v410 = vmul.f32 %v407, %v370
        %v411 = vmul.f32 %v407, %v375
        %v412 = vmul.f32 %v407, %v380
        %v413 = vmul.f32 %v407, %v385
        %v414 = vmul.f32 %v407, %v390
        %v415 = vmul.f32 %v407, %v395
        %v416 = vsel %vm399, %v360, %v408
        %v417 = vsel %vm400, %v365, %v409
        %v418 = vsel %vm401, %v370, %v410
        %v419 = vsel %vm402, %v375, %v411
        %v420 = vsel %vm403, %v380, %v412
        %v421 = vsel %vm404, %v385, %v413
        %v422 = vsel %vm405, %v390, %v414
        %v423 = vsel %vm406, %v395, %v415
        %424 = vst [vmem:[%s230] sm:$0xff] %v416
        %425 = vst [vmem:[%s230 + $0x8] sm:$0xff] %v417
        %426 = vst [vmem:[%s230 + $0x10] sm:$0xff] %v418
        %427 = vst [vmem:[%s230 + $0x18] sm:$0xff] %v419
        %428 = vst [vmem:[%s230 + $0x20] sm:$0xff] %v420
        %429 = vst [vmem:[%s230 + $0x28] sm:$0xff] %v421
        %430 = vst [vmem:[%s230 + $0x30] sm:$0xff] %v422
        %431 = vst [vmem:[%s230 + $0x38] sm:$0xff] %v423
        %s432 = sand.u32 %s140, 1
        %s433 = scalar_lea.sflag [#allocation4], %s432
        %s434 = sand.u32 %s140, 1
        %s435 = smul.addr %s434, 64
        %s436 = scalar_lea.vmem [#allocation3], %s435
        // Predicated region
        $region37: #{tpu_custom_call.1} parent=35 // pred_check
          %p437 = pneg %p150
        $region38: #{tpu_custom_call.1} parent=35 // pred_check_branch
          %439 = sbr.rel (%p437) target = $region40
        $region39: #{tpu_custom_call.1} parent=35 // pred_region
          %s440 = smul.u32 8, %s24
          %s442 = ssub.s32 1024, 1024
          %443 = vsyncadd %s433, %s442
          %s444 = sadd.s32 %s23, %s440
          %s445 = smul.addr %s444, 128
          %s446 = scalar_lea.hbm %s4, %s445
          %s447 = sshll.u32 %s436, 4
          %s448 = int_to_ptr.vmem [resolvable:$true] %s447
          %453 = dma.vmem_to_hbm [thread:$0]  %s448, 1024, %s446, %s433, 128, 128, 8
        $region40: #{tpu_custom_call.1} parent=35 // pred_fallthru
          _
      $region36: #{tpu_custom_call.1} parent=5 // pred_fallthru
        _
      %p454 = scmp.le.s32.totalorder 2, %s14
      // Predicated region
      $region41: #{tpu_custom_call.1} parent=5 // pred_check
        %p455 = pneg %p454
      $region42: #{tpu_custom_call.1} parent=5 // pred_check_branch
        %457 = sbr.rel (%p455) target = $region44
      $region43: #{tpu_custom_call.1} parent=5 // pred_region
        %s458 = ssub.s32 %s14, 2
        // Predicated region
        $region45: #{tpu_custom_call.1} parent=43 // pred_check
          %p459 = pneg %p156
        $region46: #{tpu_custom_call.1} parent=43 // pred_check_branch
          %461 = sbr.rel (%p459) target = $region48
        $region47: #{tpu_custom_call.1} parent=43 // pred_region
          %s462 = sand.u32 %s141, 1
          %s463 = scalar_lea.sflag [#allocation4], %s462
          %s464 = sand.u32 %s141, 1
          %s465 = smul.addr %s464, 64
          %s466 = scalar_lea.vmem [#allocation3], %s465
          %467 = dma.done %s463, 1024
        $region48: #{tpu_custom_call.1} parent=43 // pred_fallthru
          _
      $region44: #{tpu_custom_call.1} parent=5 // pred_fallthru
        _
    $region6: #{tpu_custom_call.1} parent=1 // loop_footer
      %s18 = sadd.s32 1, %s14
    $region7: #{tpu_custom_call.1} parent=1 // loop_footer_branch
      %13 = sbr.rel target = $region3
    $region8: #{tpu_custom_call.1} parent=1 // loop_exit
      _
    %468 = vsyncpa [#allocation4], 1
    %s469 = scalar_lea.sflag [#allocation4], 1
    %470 = vsyncpa %s469, 1

</llo_original>
